<compile_context>
chip_gen: v7x
topology: tpu7x:2x2x1
jax: 0.10.0
libtpu: 0.0.40
codegen_flags: <defaults>
</compile_context>

<pallas_src>
import functools

import jax
import jax.numpy as jnp
from jax.experimental import pallas as pl
from jax.experimental.pallas import tpu as pltpu

LANES = 128
SUBLANES = 8
NSPLIT = 2  # leading "parallel" grid axis -> both TensorCores on v7x megacore

# Per-input, per-buffer VMEM footprint is block_rows * 128 * itemsize; with two
# inputs double-buffered these caps keep the pipeline at 8 MiB total.
MAX_BLOCK_ROWS_4B = 4096   # f32:  4096 x 128 x 4B = 2 MiB / buffer
MAX_BLOCK_ROWS_2B = 8192   # bf16: 8192 x 128 x 2B = 2 MiB / buffer


def _dice_bce_kernel(x_ref, t_ref, acc_ref, *, n_valid, blocks_per_core,
                     block_elems, full_blocks):
    """Streams (block_rows, 128) tiles, accumulating per-core partial sums of
    [sigmoid(x)*t, sigmoid(x)+t, bce(x, t)] into the resident output block."""
    c = pl.program_id(0)          # core-half index ("parallel")
    i = pl.program_id(1)          # reduction step within the core-half

    @pl.when(i == 0)
    def _init():
        acc_ref[...] = jnp.zeros_like(acc_ref)

    def _fold(v):
        # (block_rows, 128) -> (block_rows//8, 8, 128) -> sum over leading axis:
        # pure cross-vreg VPU adds; the final cross-lane reduce happens once in
        # the wrapper epilogue.
        return jnp.sum(v.reshape(-1, SUBLANES, LANES), axis=0)

    def _accumulate(x32, t32):
        # Shared-exponential formulation: one EUP exp per vreg instead of the
        # separate sigmoid + softplus chains.
        #   e = exp(-|x|)
        #   softplus(x) = relu(x) + log1p(e)
        #   sigmoid(x)  = where(x >= 0, 1, e) / (1 + e)
        #   bce(x, t)   = softplus(x) - t*x        (BCE-with-logits identity)
        e = jnp.exp(-jnp.abs(x32))
        p = jnp.where(x32 >= 0.0, 1.0, e) / (1.0 + e)
        bce = jnp.maximum(x32, 0.0) + jnp.log1p(e) - t32 * x32
        # TODO(synk): if a bundle dump shows the 4 VALU slots saturating after
        # the EUP trim (v7x / bf16-on-v6e), offload one fold chain to the idle
        # MXU via ones(8, block_rows) @ quantity.
        acc_ref[0, 0] += _fold(p * t32)
        acc_ref[0, 1] += _fold(p + t32)
        acc_ref[0, 2] += _fold(bce)

    g = c * blocks_per_core + i   # global block index

    if full_blocks >= NSPLIT * blocks_per_core:
        # Statically no padded tail anywhere: single unmasked fast path.
        _accumulate(x_ref[...].astype(jnp.float32),
                    t_ref[...].astype(jnp.float32))
    else:
        @pl.when(g < full_blocks)
        def _interior():
            _accumulate(x_ref[...].astype(jnp.float32),
                        t_ref[...].astype(jnp.float32))

        @pl.when(g >= full_blocks)
        def _tail():
            xb = x_ref[...]
            tb = t_ref[...]
            rows, lanes = xb.shape
            row_ids = jax.lax.broadcasted_iota(jnp.int32, (rows, lanes), 0)
            lane_ids = jax.lax.broadcasted_iota(jnp.int32, (rows, lanes), 1)
            local = row_ids * lanes + lane_ids          # < block_elems, no overflow
            # Scalar int32 math; assumes total element count < 2**31.
            valid_in_block = jnp.maximum(n_valid - g * block_elems, 0)
            valid = local < valid_in_block
            # where-before-transcendental: padded slots become x=-100, t=0 so
            # every contribution (p*t, p+t, bce) underflows to exactly 0.
            xm = jnp.where(valid, xb.astype(jnp.float32), jnp.float32(-100.0))
            tm = jnp.where(valid, tb.astype(jnp.float32), jnp.float32(0.0))
            _accumulate(xm, tm)


def dice_bce_loss(inputs, targets, smooth=1.0):
    """Pallas-backed DiceBCELoss.forward. Returns a scalar float32."""
    assert inputs.shape == targets.shape
    n = int(inputs.size)

    # Keep native dtypes; the kernel casts to f32 per block (halves HBM traffic
    # for bf16/fp16 inputs, no wrapper-side astype copy).
    x = inputs.reshape(-1)
    t = targets.reshape(-1)

    itemsize = max(jnp.dtype(x.dtype).itemsize, jnp.dtype(t.dtype).itemsize)
    max_rows = MAX_BLOCK_ROWS_4B if itemsize >= 4 else MAX_BLOCK_ROWS_2B

    # Lane-dense (rows, 128) slab, rows a multiple of 8 sublanes.
    rows = pl.cdiv(n, LANES)
    rows = pl.cdiv(rows, SUBLANES) * SUBLANES

    # Split rows across NSPLIT core-halves of equal, equally-blocked size.
    rows_per_core = pl.cdiv(rows, NSPLIT * SUBLANES) * SUBLANES
    blocks_per_core = pl.cdiv(rows_per_core, max_rows)
    block_rows = pl.cdiv(rows_per_core, blocks_per_core * SUBLANES) * SUBLANES
    rows_cover = NSPLIT * blocks_per_core * block_rows
    n_cover = rows_cover * LANES

    block_elems = block_rows * LANES
    full_blocks = n // block_elems   # blocks with no padded tail

    # TODO(synk): avoid this full-array pad copy for ragged n by streaming the
    # aligned prefix through the kernel and folding the small remainder in a
    # tiny XLA epilogue.
    if n_cover != n:
        x = jnp.pad(x, (0, n_cover - n))
        t = jnp.pad(t, (0, n_cover - n))

    x2 = x.reshape(rows_cover, LANES)
    t2 = t.reshape(rows_cover, LANES)

    kernel = functools.partial(
        _dice_bce_kernel,
        n_valid=n,
        blocks_per_core=blocks_per_core,
        block_elems=block_elems,
        full_blocks=full_blocks,
    )

    partials = pl.pallas_call(
        kernel,
        out_shape=jax.ShapeDtypeStruct((NSPLIT, 3, SUBLANES, LANES), jnp.float32),
        grid_spec=pltpu.PrefetchScalarGridSpec(
            num_scalar_prefetch=0,
            grid=(NSPLIT, blocks_per_core),
            in_specs=[
                pl.BlockSpec((block_rows, LANES),
                             lambda c, i: (c * blocks_per_core + i, 0)),
                pl.BlockSpec((block_rows, LANES),
                             lambda c, i: (c * blocks_per_core + i, 0)),
            ],
            out_specs=pl.BlockSpec((1, 3, SUBLANES, LANES),
                                   lambda c, i: (c, 0, 0, 0)),
        ),
        compiler_params=pltpu.CompilerParams(
            dimension_semantics=("parallel", "arbitrary"),
        ),
    )(x2, t2)

    # Tiny XLA epilogue: combine per-core vreg partial sums.
    sums = jnp.sum(partials, axis=(0, 2, 3))          # (3,)
    inter, denom, bsum = sums[0], sums[1], sums[2]
    smooth = jnp.float32(smooth)
    dice_loss = 1.0 - (2.0 * inter + smooth) / (denom + smooth)
    bce_mean = bsum / jnp.float32(n)
    return bce_mean + dice_loss


def _dice_bce_ref(inputs, targets, smooth=1.0):
    p = jax.nn.sigmoid(inputs.astype(jnp.float32))
    t = targets.astype(jnp.float32)
    inter = jnp.sum(p * t)
    dice_loss = 1.0 - (2.0 * inter + smooth) / (jnp.sum(p) + jnp.sum(t) + smooth)
    eps = 1e-12
    bce = -jnp.mean(t * jnp.log(p + eps) + (1.0 - t) * jnp.log(1.0 - p + eps))
    return bce + dice_loss


if __name__ == "__main__":
    key = jax.random.PRNGKey(0)
    k1, k2, k3, k4 = jax.random.split(key, 4)

    # shapes consistent with a segmentation logits/targets pair (NCHW)
    inputs = jax.random.normal(k1, (2, 4, 16, 16), dtype=jnp.float32)
    targets = (jax.random.uniform(k2, (2, 4, 16, 16)) > 0.5).astype(jnp.float32)
    loss = jax.block_until_ready(dice_bce_loss(inputs, targets, smooth=1.0))
    ref = _dice_bce_ref(inputs, targets, smooth=1.0)
    assert jnp.allclose(loss, ref, rtol=1e-5, atol=1e-5), (loss, ref)

    # ragged shape exercising the masked-tail path
    inputs2 = jax.random.normal(k3, (2, 3, 15, 17), dtype=jnp.float32)
    targets2 = (jax.random.uniform(k4, (2, 3, 15, 17)) > 0.5).astype(jnp.float32)
    loss2 = jax.block_until_ready(dice_bce_loss(inputs2, targets2, smooth=1.0))
    ref2 = _dice_bce_ref(inputs2, targets2, smooth=1.0)
    assert jnp.allclose(loss2, ref2, rtol=1e-5, atol=1e-5), (loss2, ref2)

    print("KERNEL_OK")
</pallas_src>

<mosaic_0001>
module attributes {stable_mosaic.version = 11 : i64} {
  func.func @_dice_bce_kernel(%arg0: i32, %arg1: i32, %arg2: memref<8x128xf32, #tpu.memory_space<vmem>>, %arg3: memref<8x128xf32, #tpu.memory_space<vmem>>, %arg4: memref<1x3x8x128xf32, #tpu.memory_space<vmem>>) attributes {dimension_semantics = [#tpu.dimension_semantics<parallel>, #tpu.dimension_semantics<arbitrary>], iteration_bounds = array<i64: 2, 1>, scalar_prefetch = 0 : i64, scratch_operands = 0 : i64, tpu.core_type = #tpu.core_type<tc>, window_params = [{transform_indices = @transform_0, window_bounds = array<i64: 8, 128>}, {transform_indices = @transform_1, window_bounds = array<i64: 8, 128>}, {transform_indices = @transform_2, window_bounds = array<i64: 1, 3, 8, 128>}]} {
    %c0_i32 = arith.constant 0 : i32
    %0 = arith.cmpi eq, %arg1, %c0_i32 : i32
    %1 = arith.extui %0 : i1 to i32
    %c0_i32_0 = arith.constant 0 : i32
    %2 = arith.cmpi ne, %1, %c0_i32_0 : i32
    scf.if %2 {
      %cst_33 = arith.constant 0.000000e+00 : f32
      %48 = vector.broadcast %cst_33 : f32 to vector<1x3x8x128xf32>
      %c0_34 = arith.constant 0 : index
      %c0_35 = arith.constant 0 : index
      %c0_36 = arith.constant 0 : index
      %c0_37 = arith.constant 0 : index
      %49 = vector.load %arg4[%c0_34, %c0_35, %c0_36, %c0_37] : memref<1x3x8x128xf32, #tpu.memory_space<vmem>>, vector<1x3x8x128xf32>
      tpu.vector_store %arg4[%c0_34, %c0_35, %c0_36, %c0_37], %48 {strides = array<i32>} : memref<1x3x8x128xf32, #tpu.memory_space<vmem>>, vector<1x3x8x128xf32>,
    } else {
    }
    %c0 = arith.constant 0 : index
    %c0_1 = arith.constant 0 : index
    %3 = vector.load %arg2[%c0, %c0_1] : memref<8x128xf32, #tpu.memory_space<vmem>>, vector<8x128xf32>
    %c0_2 = arith.constant 0 : index
    %c0_3 = arith.constant 0 : index
    %4 = vector.load %arg3[%c0_2, %c0_3] : memref<8x128xf32, #tpu.memory_space<vmem>>, vector<8x128xf32>
    %5 = math.absf %3 : vector<8x128xf32>
    %cst = arith.constant 0.000000e+00 : f32
    %6 = vector.broadcast %cst : f32 to vector<8x128xf32>
    %7 = arith.subf %6, %5 : vector<8x128xf32>
    %8 = math.exp %7 : vector<8x128xf32>
    %cst_4 = arith.constant 0.000000e+00 : f32
    %9 = vector.broadcast %cst_4 : f32 to vector<8x128xf32>
    %10 = arith.cmpf oge, %3, %9 : vector<8x128xf32>
    %cst_5 = arith.constant 1.000000e+00 : f32
    %11 = vector.broadcast %cst_5 : f32 to vector<8x128xf32>
    %12 = arith.select %10, %11, %8 : vector<8x128xi1>, vector<8x128xf32>
    %cst_6 = arith.constant 1.000000e+00 : f32
    %13 = vector.broadcast %cst_6 : f32 to vector<8x128xf32>
    %14 = arith.addf %13, %8 : vector<8x128xf32>
    %15 = arith.divf %12, %14 : vector<8x128xf32>
    %cst_7 = arith.constant 0.000000e+00 : f32
    %16 = vector.broadcast %cst_7 : f32 to vector<8x128xf32>
    %17 = arith.maximumf %3, %16 : vector<8x128xf32>
    %18 = math.log1p %8 : vector<8x128xf32>
    %19 = arith.addf %17, %18 : vector<8x128xf32>
    %20 = arith.mulf %4, %3 : vector<8x128xf32>
    %21 = arith.subf %19, %20 : vector<8x128xf32>
    %c0_8 = arith.constant 0 : index
    %c0_9 = arith.constant 0 : index
    %c0_10 = arith.constant 0 : index
    %c0_11 = arith.constant 0 : index
    %22 = vector.load %arg4[%c0_8, %c0_9, %c0_10, %c0_11] : memref<1x3x8x128xf32, #tpu.memory_space<vmem>>, vector<1x1x8x128xf32>
    %23 = vector.shape_cast %22 : vector<1x1x8x128xf32> to vector<8x128xf32>
    %24 = arith.mulf %15, %4 : vector<8x128xf32>
    %25 = vector.shape_cast %24 : vector<8x128xf32> to vector<1x8x128xf32>
    %cst_12 = arith.constant dense<0.000000e+00> : vector<8x128xf32>
    %26 = vector.multi_reduction <add>, %25, %cst_12 [0] : vector<1x8x128xf32> to vector<8x128xf32>
    %27 = arith.addf %23, %26 : vector<8x128xf32>
    %c0_13 = arith.constant 0 : index
    %c0_14 = arith.constant 0 : index
    %c0_15 = arith.constant 0 : index
    %c0_16 = arith.constant 0 : index
    %28 = vector.load %arg4[%c0_13, %c0_14, %c0_15, %c0_16] : memref<1x3x8x128xf32, #tpu.memory_space<vmem>>, vector<1x1x8x128xf32>
    %29 = vector.shape_cast %28 : vector<1x1x8x128xf32> to vector<8x128xf32>
    %30 = vector.shape_cast %27 : vector<8x128xf32> to vector<1x1x8x128xf32>
    tpu.vector_store %arg4[%c0_13, %c0_14, %c0_15, %c0_16], %30 {strides = array<i32>} : memref<1x3x8x128xf32, #tpu.memory_space<vmem>>, vector<1x1x8x128xf32>,
    %c0_17 = arith.constant 0 : index
    %c1 = arith.constant 1 : index
    %c0_18 = arith.constant 0 : index
    %c0_19 = arith.constant 0 : index
    %31 = vector.load %arg4[%c0_17, %c1, %c0_18, %c0_19] : memref<1x3x8x128xf32, #tpu.memory_space<vmem>>, vector<1x1x8x128xf32>
    %32 = vector.shape_cast %31 : vector<1x1x8x128xf32> to vector<8x128xf32>
    %33 = arith.addf %15, %4 : vector<8x128xf32>
    %34 = vector.shape_cast %33 : vector<8x128xf32> to vector<1x8x128xf32>
    %cst_20 = arith.constant dense<0.000000e+00> : vector<8x128xf32>
    %35 = vector.multi_reduction <add>, %34, %cst_20 [0] : vector<1x8x128xf32> to vector<8x128xf32>
    %36 = arith.addf %32, %35 : vector<8x128xf32>
    %c0_21 = arith.constant 0 : index
    %c1_22 = arith.constant 1 : index
    %c0_23 = arith.constant 0 : index
    %c0_24 = arith.constant 0 : index
    %37 = vector.load %arg4[%c0_21, %c1_22, %c0_23, %c0_24] : memref<1x3x8x128xf32, #tpu.memory_space<vmem>>, vector<1x1x8x128xf32>
    %38 = vector.shape_cast %37 : vector<1x1x8x128xf32> to vector<8x128xf32>
    %39 = vector.shape_cast %36 : vector<8x128xf32> to vector<1x1x8x128xf32>
    tpu.vector_store %arg4[%c0_21, %c1_22, %c0_23, %c0_24], %39 {strides = array<i32>} : memref<1x3x8x128xf32, #tpu.memory_space<vmem>>, vector<1x1x8x128xf32>,
    %c0_25 = arith.constant 0 : index
    %c2 = arith.constant 2 : index
    %c0_26 = arith.constant 0 : index
    %c0_27 = arith.constant 0 : index
    %40 = vector.load %arg4[%c0_25, %c2, %c0_26, %c0_27] : memref<1x3x8x128xf32, #tpu.memory_space<vmem>>, vector<1x1x8x128xf32>
    %41 = vector.shape_cast %40 : vector<1x1x8x128xf32> to vector<8x128xf32>
    %42 = vector.shape_cast %21 : vector<8x128xf32> to vector<1x8x128xf32>
    %cst_28 = arith.constant dense<0.000000e+00> : vector<8x128xf32>
    %43 = vector.multi_reduction <add>, %42, %cst_28 [0] : vector<1x8x128xf32> to vector<8x128xf32>
    %44 = arith.addf %41, %43 : vector<8x128xf32>
    %c0_29 = arith.constant 0 : index
    %c2_30 = arith.constant 2 : index
    %c0_31 = arith.constant 0 : index
    %c0_32 = arith.constant 0 : index
    %45 = vector.load %arg4[%c0_29, %c2_30, %c0_31, %c0_32] : memref<1x3x8x128xf32, #tpu.memory_space<vmem>>, vector<1x1x8x128xf32>
    %46 = vector.shape_cast %45 : vector<1x1x8x128xf32> to vector<8x128xf32>
    %47 = vector.shape_cast %44 : vector<8x128xf32> to vector<1x1x8x128xf32>
    tpu.vector_store %arg4[%c0_29, %c2_30, %c0_31, %c0_32], %47 {strides = array<i32>} : memref<1x3x8x128xf32, #tpu.memory_space<vmem>>, vector<1x1x8x128xf32>,
    return
  }
  func.func @transform_0(%arg0: i32, %arg1: i32) -> (i32, i32) {
    %c1_i32 = arith.constant 1 : i32
    %0 = arith.muli %arg0, %c1_i32 : i32
    %1 = arith.addi %0, %arg1 : i32
    %c0_i32 = arith.constant 0 : i32
    %c0_i32_0 = arith.constant 0 : i32
    return %1, %c0_i32 : i32, i32
  }
  func.func @transform_1(%arg0: i32, %arg1: i32) -> (i32, i32) {
    %c1_i32 = arith.constant 1 : i32
    %0 = arith.muli %arg0, %c1_i32 : i32
    %1 = arith.addi %0, %arg1 : i32
    %c0_i32 = arith.constant 0 : i32
    %c0_i32_0 = arith.constant 0 : i32
    return %1, %c0_i32 : i32, i32
  }
  func.func @transform_2(%arg0: i32, %arg1: i32) -> (i32, i32, i32, i32) {
    %c0_i32 = arith.constant 0 : i32
    %c0_i32_0 = arith.constant 0 : i32
    %c0_i32_1 = arith.constant 0 : i32
    %c0_i32_2 = arith.constant 0 : i32
    return %arg0, %c0_i32, %c0_i32_0, %c0_i32_1 : i32, i32, i32, i32
  }
}

</mosaic_0001>

<llo_original>
// kernel: tpu_custom_call.1
$region0: #{tpu_custom_call.1}
  #allocation0 [shape = 'u32[]', space=smem, size = 0x4, offset = 0x4, fixed_abs, tag = 'smem constant byte address 0x4 - core index']
  #allocation1 [shape = 'u32[144,128]{1,0:T(1,128)}', space=vmem, size = 0x12000, scoped, tag = 'internal scratch']
  %s0 = inlined_call_operand.hbm [shape: f32[16,128], index: 0, kind: input, shape index: {}]
  %s1 = inlined_call_operand.hbm [shape: f32[16,128], index: 1, kind: input, shape index: {}]
  %s2 = inlined_call_operand.hbm [shape: f32[2,3,8,128], index: 2, kind: output, shape index: {}]
  %s3 = sld [smem:[#allocation0]]
  $region53: #{tpu_custom_call.1} parent=0
    _
  %s5 = ssub.s32 1, %s3
  %s6 = scalar_select 0, %s5, %s3
  $region1: #{tpu_custom_call.1} parent=0
    #allocation2 [shape = 'u8[8192]{0}', space=vmem, size = 0x2000, scoped, tag = 'input window, operand 0']
    #allocation3 [shape = 's32[2]{0}', space=sflag, size = 0x8, scoped, tag = 'scoped memory for tpu_custom_call.1']
    #allocation4 [shape = 's32[2]{0}', space=sflag, size = 0x8, scoped, tag = 'scoped memory for tpu_custom_call.1']
    #allocation5 [shape = 'u8[8192]{0}', space=vmem, size = 0x2000, scoped, tag = 'input window, operand 1']
    #allocation6 [shape = 's32[2]{0}', space=sflag, size = 0x8, scoped, tag = 'scoped memory for tpu_custom_call.1']
    #allocation7 [shape = 'u8[24576]{0}', space=vmem, size = 0x6000, scoped, tag = 'output window, operand 0']
    %7 = vsyncpa [#allocation3], 0
    %s8 = scalar_lea.sflag [#allocation3], 1
    %9 = vsyncpa %s8, 0
    %10 = vsyncpa [#allocation6], 0
    %s11 = scalar_lea.sflag [#allocation6], 1
    %12 = vsyncpa %s11, 0
    %13 = vsyncpa [#allocation4], 0
    %s14 = scalar_lea.sflag [#allocation4], 1
    %15 = vsyncpa %s14, 0
    loop: start=0, step=1, limit=4
    $region2: #{tpu_custom_call.1} parent=1 // loop_pre_header
      _
    $region3: #{tpu_custom_call.1} parent=1 // loop_header
      %s17 = sphi 0, %s21
      %p18 = scmp.ge.s32.totalorder %s17, 4
      %s24 = sphi 0, %s36
      %s25 = sphi 0, %s32
      %s26 = sphi 0, %s24
      %s27 = sphi 0, %s25
      %s28 = sphi 0, %s26
      %s29 = sphi 0, %s27
      %s41 = sphi 0, %s43
      %s44 = sphi 0, %s41
      %s45 = sphi 0, %s44
      %s61 = sphi 0, %s45
      %s69 = sphi 0, %s71
      %s72 = sphi 0, %s69
      %s73 = sphi 0, %s72
      %s89 = sphi 0, %s73
      %s95 = sphi 0, %s97
      %s98 = sphi 0, %s95
      %s99 = sphi 0, %s98
      %s115 = sphi 0, %s99
    $region4: #{tpu_custom_call.1} parent=1 // loop_header_branch
      %20 = sbr.rel (%p18) target = $region8
    $region5: #{tpu_custom_call.1} parent=1 // loop_body
      %s22 = ssub.s32 %s17, 1
      %s23 = ssub.s32 %s17, 2
      %s30 = sadd.s32 1, %s25
      %p31 = scmp.ge.s32.totalorder %s30, 1
      %s32 = scalar_select %p31, 0, %s30
      %s33 = sadd.s32 1, %s24
      %s34 = scalar_select %p31, %s33, %s24
      %p35 = scmp.ge.s32.totalorder %s34, 2
      %s36 = scalar_select %p35, 0, %s34
      %s37 = sadd.s32 %s24, %s25
      %s38 = sadd.s32 %s36, %s32
      %s39 = ssub.s32 %s37, %s38
      %p40 = scmp.eq.s32.totalorder %s39, 0
      %s42 = sadd.s32 %s41, 1
      %s43 = scalar_select %p40, %s41, %s42
      %p46 = pneg %p40
      %p47 = scmp.eq.s32.totalorder %s17, 1
      %p48 = por %p46, %p47
      %p49 = scmp.ne.s32.totalorder %s41, %s44
      %p50 = scmp.eq.s32.totalorder %s17, 0
      %p51 = por %p49, %p50
      %p52 = scmp.ne.s32.totalorder %s41, %s44
      %p53 = scmp.eq.s32.totalorder %s22, 1
      %p54 = por %p52, %p53
      %p55 = scmp.ne.s32.totalorder %s44, %s45
      %p56 = scmp.eq.s32.totalorder %s22, 0
      %p57 = por %p55, %p56
      %p58 = scmp.ne.s32.totalorder %s44, %s45
      %p59 = scmp.eq.s32.totalorder %s23, 1
      %p60 = por %p58, %p59
      %p62 = scmp.ne.s32.totalorder %s45, %s61
      %p63 = scmp.eq.s32.totalorder %s23, 0
      %p64 = por %p62, %p63
      %s65 = sadd.s32 %s24, %s25
      %s66 = sadd.s32 %s36, %s32
      %s67 = ssub.s32 %s65, %s66
      %p68 = scmp.eq.s32.totalorder %s67, 0
      %s70 = sadd.s32 %s69, 1
      %s71 = scalar_select %p68, %s69, %s70
      %p74 = pneg %p68
      %p75 = scmp.eq.s32.totalorder %s17, 1
      %p76 = por %p74, %p75
      %p77 = scmp.ne.s32.totalorder %s69, %s72
      %p78 = scmp.eq.s32.totalorder %s17, 0
      %p79 = por %p77, %p78
      %p80 = scmp.ne.s32.totalorder %s69, %s72
      %p81 = scmp.eq.s32.totalorder %s22, 1
      %p82 = por %p80, %p81
      %p83 = scmp.ne.s32.totalorder %s72, %s73
      %p84 = scmp.eq.s32.totalorder %s22, 0
      %p85 = por %p83, %p84
      %p86 = scmp.ne.s32.totalorder %s72, %s73
      %p87 = scmp.eq.s32.totalorder %s23, 1
      %p88 = por %p86, %p87
      %p90 = scmp.ne.s32.totalorder %s73, %s89
      %p91 = scmp.eq.s32.totalorder %s23, 0
      %p92 = por %p90, %p91
      %s93 = ssub.s32 %s24, %s36
      %p94 = scmp.eq.s32.totalorder %s93, 0
      %s96 = sadd.s32 %s95, 1
      %s97 = scalar_select %p94, %s95, %s96
      %p100 = pneg %p94
      %p101 = scmp.eq.s32.totalorder %s17, 1
      %p102 = por %p100, %p101
      %p103 = scmp.ne.s32.totalorder %s95, %s98
      %p104 = scmp.eq.s32.totalorder %s17, 0
      %p105 = por %p103, %p104
      %p106 = scmp.ne.s32.totalorder %s95, %s98
      %p107 = scmp.eq.s32.totalorder %s22, 1
      %p108 = por %p106, %p107
      %p109 = scmp.ne.s32.totalorder %s98, %s99
      %p110 = scmp.eq.s32.totalorder %s22, 0
      %p111 = por %p109, %p110
      %p112 = scmp.ne.s32.totalorder %s98, %s99
      %p113 = scmp.eq.s32.totalorder %s23, 1
      %p114 = por %p112, %p113
      %p116 = scmp.ne.s32.totalorder %s99, %s115
      %p117 = scmp.eq.s32.totalorder %s23, 0
      %p118 = por %p116, %p117
      %p119 = scmp.le.s32.totalorder 1, %s17
      %p120 = scmp.lt.s32.totalorder %s17, 3
      %p121 = pnand %p119, %p120
      %p122 = pneg %p121
      // Predicated region
      $region9: #{tpu_custom_call.1} parent=5 // pred_check
        _
      $region10: #{tpu_custom_call.1} parent=5 // pred_check_branch
        %124 = sbr.rel (%p121) target = $region12
      $region11: #{tpu_custom_call.1} parent=5 // pred_region
        %s125 = ssub.s32 %s17, 1
      $region12: #{tpu_custom_call.1} parent=5 // pred_fallthru
        _
      %p126 = scmp.lt.s32.totalorder %s17, 2
      // Predicated region
      $region13: #{tpu_custom_call.1} parent=5 // pred_check
        %p127 = pneg %p126
      $region14: #{tpu_custom_call.1} parent=5 // pred_check_branch
        %129 = sbr.rel (%p127) target = $region16
      $region15: #{tpu_custom_call.1} parent=5 // pred_region
        // Predicated region
        $region17: #{tpu_custom_call.1} parent=15 // pred_check
          %p130 = pneg %p51
        $region18: #{tpu_custom_call.1} parent=15 // pred_check_branch
          %132 = sbr.rel (%p130) target = $region20
        $region19: #{tpu_custom_call.1} parent=15 // pred_region
          %s133 = sand.u32 %s41, 1
          %s134 = scalar_lea.sflag [#allocation3], %s133
          %s135 = sand.u32 %s41, 1
          %s136 = smul.addr %s135, 8
          %s137 = scalar_lea.vmem [#allocation2], %s136
          %s138 = sadd.s32 %s24, %s25
          %s140 = ssub.s32 128, 128
          %141 = vsyncadd %s134, %s140
          %s142 = smul.addr %s138, 128
          %s143 = scalar_lea.hbm %s0, %s142
          %s145 = sshll.u32 %s137, 4
          %s146 = int_to_ptr.vmem [resolvable:$true] %s145
          %148 = dma.hbm_to_vmem [thread:$0]  %s143, 128, %s146, %s134
        $region20: #{tpu_custom_call.1} parent=15 // pred_fallthru
          _
        // Predicated region
        $region21: #{tpu_custom_call.1} parent=15 // pred_check
          %p149 = pneg %p79
        $region22: #{tpu_custom_call.1} parent=15 // pred_check_branch
          %151 = sbr.rel (%p149) target = $region24
        $region23: #{tpu_custom_call.1} parent=15 // pred_region
          %s152 = sand.u32 %s69, 1
          %s153 = scalar_lea.sflag [#allocation6], %s152
          %s154 = sand.u32 %s69, 1
          %s155 = smul.addr %s154, 8
          %s156 = scalar_lea.vmem [#allocation5], %s155
          %s157 = sadd.s32 %s24, %s25
          %s159 = ssub.s32 128, 128
          %160 = vsyncadd %s153, %s159
          %s161 = smul.addr %s157, 128
          %s162 = scalar_lea.hbm %s1, %s161
          %s164 = sshll.u32 %s156, 4
          %s165 = int_to_ptr.vmem [resolvable:$true] %s164
          %167 = dma.hbm_to_vmem [thread:$0]  %s162, 128, %s165, %s153
        $region24: #{tpu_custom_call.1} parent=15 // pred_fallthru
          _
      $region16: #{tpu_custom_call.1} parent=5 // pred_fallthru
        _
      %p168 = scmp.le.s32.totalorder 1, %s17
      %p169 = scmp.lt.s32.totalorder %s17, 3
      %p170 = pnand %p168, %p169
      %p171 = pneg %p170
      // Predicated region
      $region25: #{tpu_custom_call.1} parent=5 // pred_check
        _
      $region26: #{tpu_custom_call.1} parent=5 // pred_check_branch
        %173 = sbr.rel (%p170) target = $region28
      $region27: #{tpu_custom_call.1} parent=5 // pred_region
        %s174 = ssub.s32 %s17, 1
        %s175 = sand.u32 %s44, 1
        %s176 = scalar_lea.sflag [#allocation3], %s175
        %s177 = sand.u32 %s44, 1
        %s178 = smul.addr %s177, 8
        %s179 = scalar_lea.vmem [#allocation2], %s178
        // Predicated region
        $region29: #{tpu_custom_call.1} parent=27 // pred_check
          %p180 = pneg %p57
        $region30: #{tpu_custom_call.1} parent=27 // pred_check_branch
          %182 = sbr.rel (%p180) target = $region32
        $region31: #{tpu_custom_call.1} parent=27 // pred_region
          %183 = dma.done %s176, 128
        $region32: #{tpu_custom_call.1} parent=27 // pred_fallthru
          _
        %s184 = sand.u32 %s72, 1
        %s185 = scalar_lea.sflag [#allocation6], %s184
        %s186 = sand.u32 %s72, 1
        %s187 = smul.addr %s186, 8
        %s188 = scalar_lea.vmem [#allocation5], %s187
        // Predicated region
        $region33: #{tpu_custom_call.1} parent=27 // pred_check
          %p189 = pneg %p85
        $region34: #{tpu_custom_call.1} parent=27 // pred_check_branch
          %191 = sbr.rel (%p189) target = $region36
        $region35: #{tpu_custom_call.1} parent=27 // pred_region
          %192 = dma.done %s185, 128
        $region36: #{tpu_custom_call.1} parent=27 // pred_fallthru
          _
        %s193 = sand.u32 %s44, 1
        %s194 = scalar_lea.sflag [#allocation3], %s193
        %s195 = sand.u32 %s44, 1
        %s196 = smul.addr %s195, 8
        %s197 = scalar_lea.vmem [#allocation2], %s196
        %p198 = pneg %p57
        %p199 = pneg %p54
        %s200 = sand.u32 %s72, 1
        %s201 = scalar_lea.sflag [#allocation6], %s200
        %s202 = sand.u32 %s72, 1
        %s203 = smul.addr %s202, 8
        %s204 = scalar_lea.vmem [#allocation5], %s203
        %p205 = pneg %p85
        %p206 = pneg %p82
        %p207 = pneg %p111
        %p208 = pneg %p108
        %s209 = sand.u32 %s98, 1
        %s210 = scalar_lea.sflag [#allocation4], %s209
        %s211 = sand.u32 %s98, 1
        %s212 = smul.addr %s211, 24
        %s213 = scalar_lea.vmem [#allocation7], %s212
        %s214 = sadd.s32 %s26, %s27
        %s215 = sadd.s32 %s26, %s27
        %p216 = scmp.eq.s32.totalorder %s27, 0
        // Predicated region
        $region37: #{tpu_custom_call.1} parent=27 // pred_check
          %p217 = pneg %p216
        $region38: #{tpu_custom_call.1} parent=27 // pred_check_branch
          %219 = sbr.rel (%p217) target = $region40
        $region39: #{tpu_custom_call.1} parent=27 // pred_region
          %220 = vst [vmem:[%s213] sm:$0xff] 0.0
          %221 = vst [vmem:[%s213 + $0x8] sm:$0xff] 0.0
          %222 = vst [vmem:[%s213 + $0x10] sm:$0xff] 0.0
        $region40: #{tpu_custom_call.1} parent=27 // pred_fallthru
          _
        %v223 = vld [vmem:[%s179] sm:$0xff]
        %v224 = vld [vmem:[%s188] sm:$0xff]
        %v225 = vand.u32 2147483647, %v223
        %v226 = vsub.f32 0.0, %v225
        %v227 = vmul.f32 %v226, 1.442695
        %v228 = vpow.pop %v227
        %vm229 = vcmp.ge.f32.partialorder %v223, 0.0
        %v230 = vsel %vm229, 1.0, %v228
        %v231 = vadd.f32 %v228, 1.0
        %v232 = vrcp.pop %v231
        %v233 = vmul.f32 %v230, %v232
        %v234 = vmax.f32 %v223, 0.0
        %v235 = vadd.f32 %v228, 1.0
        %v236 = vlog2.pop %v235
        %v237 = vmul.f32 %v236, 0.6931472
        %v238 = vmul.f32 -0.5, %v228
        %v239 = vadd.f32 %v238, 1.0
        %v240 = vmul.f32 %v239, %v228
        %v241 = vand.u32 2147483647, %v228
        %vm242 = vcmp.lt.f32.partialorder %v241, 0.0004427343
        %v243 = vsel %vm242, %v240, %v237
        %v244 = vadd.f32 %v234, %v243
        %v245 = vmul.f32 %v224, %v223
        %v246 = vsub.f32 %v244, %v245
        %v247 = vld [vmem:[%s213] sm:$0xff]
        %v248 = vmul.f32 %v233, %v224
        %v249 = vadd.f32 %v248, 0.0
        %v250 = vadd.f32 %v247, %v249
        %251 = vst [vmem:[%s213] sm:$0xff] %v250
        %s252 = scalar_lea.vmem %s213, 8 [#allocation7]
        %v253 = vld [vmem:[%s252] sm:$0xff]
        %v254 = vadd.f32 %v233, %v224
        %v255 = vadd.f32 %v254, 0.0
        %v256 = vadd.f32 %v253, %v255
        %257 = vst [vmem:[%s252] sm:$0xff] %v256
        %s258 = scalar_lea.vmem %s213, 16 [#allocation7]
        %v259 = vld [vmem:[%s258] sm:$0xff]
        %v260 = vadd.f32 %v246, 0.0
        %v261 = vadd.f32 %v259, %v260
        %262 = vst [vmem:[%s258] sm:$0xff] %v261
        %s263 = sand.u32 %s98, 1
        %s264 = scalar_lea.sflag [#allocation4], %s263
        %s265 = sand.u32 %s98, 1
        %s266 = smul.addr %s265, 24
        %s267 = scalar_lea.vmem [#allocation7], %s266
        // Predicated region
        $region41: #{tpu_custom_call.1} parent=27 // pred_check
          %p268 = pneg %p108
        $region42: #{tpu_custom_call.1} parent=27 // pred_check_branch
          %270 = sbr.rel (%p268) target = $region44
        $region43: #{tpu_custom_call.1} parent=27 // pred_region
          %s272 = ssub.s32 384, 384
          %273 = vsyncadd %s264, %s272
          %s274 = smul.addr %s26, 3
          %s275 = smul.addr %s274, 128
          %s276 = scalar_lea.hbm %s2, %s275
          %s277 = sshll.u32 %s267, 4
          %s278 = int_to_ptr.vmem [resolvable:$true] %s277
          %283 = dma.vmem_to_hbm [thread:$0]  %s278, 384, %s276, %s264, 128, 128, 8
        $region44: #{tpu_custom_call.1} parent=27 // pred_fallthru
          _
      $region28: #{tpu_custom_call.1} parent=5 // pred_fallthru
        _
      %p284 = scmp.le.s32.totalorder 2, %s17
      // Predicated region
      $region45: #{tpu_custom_call.1} parent=5 // pred_check
        %p285 = pneg %p284
      $region46: #{tpu_custom_call.1} parent=5 // pred_check_branch
        %287 = sbr.rel (%p285) target = $region48
      $region47: #{tpu_custom_call.1} parent=5 // pred_region
        %s288 = ssub.s32 %s17, 2
        // Predicated region
        $region49: #{tpu_custom_call.1} parent=47 // pred_check
          %p289 = pneg %p114
        $region50: #{tpu_custom_call.1} parent=47 // pred_check_branch
          %291 = sbr.rel (%p289) target = $region52
        $region51: #{tpu_custom_call.1} parent=47 // pred_region
          %s292 = sand.u32 %s99, 1
          %s293 = scalar_lea.sflag [#allocation4], %s292
          %s294 = sand.u32 %s99, 1
          %s295 = smul.addr %s294, 24
          %s296 = scalar_lea.vmem [#allocation7], %s295
          %297 = dma.done %s293, 384
        $region52: #{tpu_custom_call.1} parent=47 // pred_fallthru
          _
      $region48: #{tpu_custom_call.1} parent=5 // pred_fallthru
        _
    $region6: #{tpu_custom_call.1} parent=1 // loop_footer
      %s21 = sadd.s32 1, %s17
    $region7: #{tpu_custom_call.1} parent=1 // loop_footer_branch
      %16 = sbr.rel target = $region3
    $region8: #{tpu_custom_call.1} parent=1 // loop_exit
      _
    %298 = vsyncpa [#allocation3], 1
    %s299 = scalar_lea.sflag [#allocation3], 1
    %300 = vsyncpa %s299, 1
    %301 = vsyncpa [#allocation6], 1
    %s302 = scalar_lea.sflag [#allocation6], 1
    %303 = vsyncpa %s302, 1
    %304 = vsyncpa [#allocation4], 1
    %s305 = scalar_lea.sflag [#allocation4], 1
    %306 = vsyncpa %s305, 1

</llo_original>
